<compile_context>
chip_gen: v6e
topology: v6e:2x2x1
jax: 0.10.0
libtpu: 0.0.40
codegen_flags: <defaults>
</compile_context>

<pallas_src>
import functools

import jax
import jax.numpy as jnp
from jax.experimental import pallas as pl
from jax.experimental.pallas import tpu as pltpu


def _round_up(x: int, m: int) -> int:
    return ((x + m - 1) // m) * m


def bert_embeddings_kernel(words_ref, tt_ref, pos_ref, type_tab_ref,
                           gamma_ref, beta_ref, o_ref, *, eps: float):
    # words_ref : (ts, H)  gathered word embeddings for this tile
    # tt_ref    : (ts, 1)  int32 token-type ids
    # pos_ref   : (ts, H)  position-embedding rows for this seq tile (via BlockSpec)
    # type_tab  : (T, H)   full token-type embedding table (VMEM resident)
    x = words_ref[...].astype(jnp.float32) + pos_ref[...].astype(jnp.float32)

    # Token-type embedding: select-accumulate over the (tiny, static) type vocab.
    tt = tt_ref[...]                                   # (ts, 1) int32
    num_types = type_tab_ref.shape[0]
    for t in range(num_types):
        row = type_tab_ref[pl.ds(t, 1), :].astype(jnp.float32)      # (1, H)
        x = x + jnp.where(tt == t, 1.0, 0.0) * row                  # (ts, H)

    # TF-style LayerNorm over the hidden dim (biased variance, eps inside sqrt).
    u = jnp.mean(x, axis=-1, keepdims=True)
    d = x - u
    s = jnp.mean(d * d, axis=-1, keepdims=True)
    xn = d * jax.lax.rsqrt(s + eps)
    out = gamma_ref[...] * xn + beta_ref[...]

    # Dropout is identity in inference mode.
    o_ref[...] = out.astype(o_ref.dtype)


def bert_embeddings(input_ids, word_table, pos_table, type_table, gamma, beta,
                    token_type_ids=None, *, eps: float = 1e-12, ts_max: int = 256,
                    bool_input_embedding: bool = False):
    """input_ids: [B, S] int32 (or [B, S, H] embeddings if bool_input_embedding);
    word_table: [V, H]; pos_table: [P, H]; type_table: [T, H]; gamma, beta: [H].
    Returns [B, S, H]."""
    if bool_input_embedding:
        words = input_ids
        B, S, H = words.shape
    else:
        B, S = input_ids.shape
        H = word_table.shape[-1]
        # TODO(synk): fuse this large-vocab gather into the kernel via a manual
        # DMA gather; for now XLA handles the lookup.
        words = jnp.take(word_table, input_ids, axis=0)             # [B, S, H]

    if token_type_ids is None:
        token_type_ids = jnp.zeros((B, S), dtype=jnp.int32)
    token_type_ids = token_type_ids.astype(jnp.int32)

    # Seq tiling: ts multiple of 8 (f32 sublane); pad S up so blocks are full.
    ts = min(ts_max, _round_up(S, 8))
    S_pad = _round_up(S, ts)

    pos_slice = pos_table[:S]
    if S_pad != S:
        words = jnp.pad(words, ((0, 0), (0, S_pad - S), (0, 0)))
        token_type_ids = jnp.pad(token_type_ids, ((0, 0), (0, S_pad - S)))
        pos_slice = jnp.pad(pos_slice, ((0, S_pad - S), (0, 0)))

    tt = token_type_ids.reshape(B, S_pad, 1)
    g2 = gamma.reshape(1, H)
    b2 = beta.reshape(1, H)
    T = type_table.shape[0]

    grid = (B, S_pad // ts)
    out = pl.pallas_call(
        functools.partial(bert_embeddings_kernel, eps=eps),
        out_shape=jax.ShapeDtypeStruct((B, S_pad, H), words.dtype),
        grid_spec=pl.GridSpec(
            grid=grid,
            in_specs=[
                pl.BlockSpec((None, ts, H), lambda b, j: (b, j, 0)),  # word embeds
                pl.BlockSpec((None, ts, 1), lambda b, j: (b, j, 0)),  # token-type ids
                pl.BlockSpec((ts, H), lambda b, j: (j, 0)),           # position rows
                pl.BlockSpec((T, H), lambda b, j: (0, 0)),            # type table (resident)
                pl.BlockSpec((1, H), lambda b, j: (0, 0)),            # LN gamma
                pl.BlockSpec((1, H), lambda b, j: (0, 0)),            # LN beta
            ],
            out_specs=pl.BlockSpec((None, ts, H), lambda b, j: (b, j, 0)),
        ),
        compiler_params=pltpu.CompilerParams(
            dimension_semantics=("parallel", "parallel"),
            # Raise v5e's 16 MiB scoped default; safely below v7x's 64 MiB physical.
            vmem_limit_bytes=32 * 1024 * 1024,
        ),
    )(words, tt, pos_slice, type_table, g2, b2)

    if S_pad != S:
        out = out[:, :S, :]
    return out


def reference(input_ids, word_table, pos_table, type_table, gamma, beta,
              token_type_ids=None, eps=1e-12):
    B, S = input_ids.shape
    words = word_table[input_ids]
    pos = pos_table[jnp.arange(S)][None, :, :]
    if token_type_ids is None:
        token_type_ids = jnp.zeros((B, S), dtype=jnp.int32)
    tte = type_table[token_type_ids]
    x = words + pos + tte
    u = jnp.mean(x, axis=-1, keepdims=True)
    s = jnp.mean((x - u) ** 2, axis=-1, keepdims=True)
    x = (x - u) / jnp.sqrt(s + eps)
    return gamma * x + beta


if __name__ == "__main__":
    # Small BERT-like config: vocab=64, max_pos=16, type_vocab=2, hidden=32, B=2, S=8.
    B, S, H = 2, 8, 32
    VOCAB, MAX_POS, TYPES = 64, 16, 2

    key = jax.random.PRNGKey(0)
    k1, k2, k3, k4, k5 = jax.random.split(key, 5)

    input_ids = jax.random.randint(k1, (B, S), 0, VOCAB, dtype=jnp.int32)
    token_type_ids = jax.random.randint(k2, (B, S), 0, TYPES, dtype=jnp.int32)

    word_table = jax.random.normal(k3, (VOCAB, H), dtype=jnp.float32) * 0.02
    pos_table = jax.random.normal(k4, (MAX_POS, H), dtype=jnp.float32) * 0.02
    type_table = jax.random.normal(k5, (TYPES, H), dtype=jnp.float32) * 0.02
    gamma = jnp.ones((H,), dtype=jnp.float32)   # LayerNorm weight init = ones
    beta = jnp.zeros((H,), dtype=jnp.float32)   # LayerNorm bias init = zeros

    out = bert_embeddings(input_ids, word_table, pos_table, type_table,
                          gamma, beta, token_type_ids=token_type_ids)
    out = jax.block_until_ready(out)

    ref = reference(input_ids, word_table, pos_table, type_table,
                    gamma, beta, token_type_ids=token_type_ids)
    assert out.shape == (B, S, H)
    assert jnp.allclose(out, ref, atol=1e-5, rtol=1e-5), "mismatch vs reference"

    print("KERNEL_OK")
</pallas_src>

<mosaic_0001>
module attributes {stable_mosaic.version = 11 : i64} {
  func.func @bert_embeddings_kernel(%arg0: i32, %arg1: i32, %arg2: memref<1x8x32xf32, #tpu.memory_space<vmem>>, %arg3: memref<1x8x1xi32, #tpu.memory_space<vmem>>, %arg4: memref<8x32xf32, #tpu.memory_space<vmem>>, %arg5: memref<2x32xf32, #tpu.memory_space<vmem>>, %arg6: memref<1x32xf32, #tpu.memory_space<vmem>>, %arg7: memref<1x32xf32, #tpu.memory_space<vmem>>, %arg8: memref<1x8x32xf32, #tpu.memory_space<vmem>>) attributes {dimension_semantics = [#tpu.dimension_semantics<parallel>, #tpu.dimension_semantics<parallel>], iteration_bounds = array<i64: 2, 1>, scalar_prefetch = 0 : i64, scratch_operands = 0 : i64, tpu.core_type = #tpu.core_type<tc>, window_params = [{transform_indices = @transform_0, window_bounds = array<i64: 1, 8, 32>}, {transform_indices = @transform_1, window_bounds = array<i64: 1, 8, 1>}, {transform_indices = @transform_2, window_bounds = array<i64: 8, 32>}, {pipeline_mode = #tpu.pipeline_mode<synchronous>, transform_indices = @transform_3, window_bounds = array<i64: 2, 32>}, {pipeline_mode = #tpu.pipeline_mode<synchronous>, transform_indices = @transform_4, window_bounds = array<i64: 1, 32>}, {pipeline_mode = #tpu.pipeline_mode<synchronous>, transform_indices = @transform_5, window_bounds = array<i64: 1, 32>}, {transform_indices = @transform_6, window_bounds = array<i64: 1, 8, 32>}]} {
    %c0 = arith.constant 0 : index
    %c0_0 = arith.constant 0 : index
    %c0_1 = arith.constant 0 : index
    %0 = vector.load %arg2[%c0, %c0_0, %c0_1] : memref<1x8x32xf32, #tpu.memory_space<vmem>>, vector<1x8x32xf32>
    %1 = vector.shape_cast %0 : vector<1x8x32xf32> to vector<8x32xf32>
    %c0_2 = arith.constant 0 : index
    %c0_3 = arith.constant 0 : index
    %2 = vector.load %arg4[%c0_2, %c0_3] : memref<8x32xf32, #tpu.memory_space<vmem>>, vector<8x32xf32>
    %3 = arith.addf %1, %2 : vector<8x32xf32>
    %c0_4 = arith.constant 0 : index
    %c0_5 = arith.constant 0 : index
    %c0_6 = arith.constant 0 : index
    %4 = vector.load %arg3[%c0_4, %c0_5, %c0_6] : memref<1x8x1xi32, #tpu.memory_space<vmem>>, vector<1x8x1xi32>
    %5 = vector.shape_cast %4 : vector<1x8x1xi32> to vector<8x1xi32>
    %c0_7 = arith.constant 0 : index
    %c0_8 = arith.constant 0 : index
    %6 = vector.load %arg5[%c0_7, %c0_8] : memref<2x32xf32, #tpu.memory_space<vmem>>, vector<1x32xf32>
    %c0_i32 = arith.constant 0 : i32
    %7 = vector.broadcast %c0_i32 : i32 to vector<8x1xi32>
    %8 = arith.cmpi eq, %5, %7 : vector<8x1xi32>
    %cst = arith.constant 1.000000e+00 : f32
    %cst_9 = arith.constant 0.000000e+00 : f32
    %9 = vector.broadcast %cst : f32 to vector<8x1xf32>
    %10 = vector.broadcast %cst_9 : f32 to vector<8x1xf32>
    %11 = arith.select %8, %9, %10 : vector<8x1xi1>, vector<8x1xf32>
    %12 = vector.broadcast %11 : vector<8x1xf32> to vector<8x32xf32>
    %13 = vector.broadcast %6 : vector<1x32xf32> to vector<8x32xf32>
    %14 = arith.mulf %12, %13 : vector<8x32xf32>
    %15 = arith.addf %3, %14 : vector<8x32xf32>
    %c1 = arith.constant 1 : index
    %c0_10 = arith.constant 0 : index
    %16 = vector.load %arg5[%c1, %c0_10] : memref<2x32xf32, #tpu.memory_space<vmem>>, vector<1x32xf32>
    %c1_i32 = arith.constant 1 : i32
    %17 = vector.broadcast %c1_i32 : i32 to vector<8x1xi32>
    %18 = arith.cmpi eq, %5, %17 : vector<8x1xi32>
    %cst_11 = arith.constant 1.000000e+00 : f32
    %cst_12 = arith.constant 0.000000e+00 : f32
    %19 = vector.broadcast %cst_11 : f32 to vector<8x1xf32>
    %20 = vector.broadcast %cst_12 : f32 to vector<8x1xf32>
    %21 = arith.select %18, %19, %20 : vector<8x1xi1>, vector<8x1xf32>
    %22 = vector.broadcast %21 : vector<8x1xf32> to vector<8x32xf32>
    %23 = vector.broadcast %16 : vector<1x32xf32> to vector<8x32xf32>
    %24 = arith.mulf %22, %23 : vector<8x32xf32>
    %25 = arith.addf %15, %24 : vector<8x32xf32>
    %cst_13 = arith.constant dense<0.000000e+00> : vector<8xf32>
    %26 = vector.multi_reduction <add>, %25, %cst_13 [1] : vector<8x32xf32> to vector<8xf32>
    %27 = vector.shape_cast %26 : vector<8xf32> to vector<8x1xf32>
    %cst_14 = arith.constant 3.200000e+01 : f32
    %28 = vector.broadcast %cst_14 : f32 to vector<8x1xf32>
    %29 = arith.divf %27, %28 : vector<8x1xf32>
    %30 = vector.broadcast %29 : vector<8x1xf32> to vector<8x32xf32>
    %31 = arith.subf %25, %30 : vector<8x32xf32>
    %32 = arith.mulf %31, %31 : vector<8x32xf32>
    %cst_15 = arith.constant dense<0.000000e+00> : vector<8xf32>
    %33 = vector.multi_reduction <add>, %32, %cst_15 [1] : vector<8x32xf32> to vector<8xf32>
    %34 = vector.shape_cast %33 : vector<8xf32> to vector<8x1xf32>
    %cst_16 = arith.constant 3.200000e+01 : f32
    %35 = vector.broadcast %cst_16 : f32 to vector<8x1xf32>
    %36 = arith.divf %34, %35 : vector<8x1xf32>
    %cst_17 = arith.constant 9.99999996E-13 : f32
    %37 = vector.broadcast %cst_17 : f32 to vector<8x1xf32>
    %38 = arith.addf %36, %37 : vector<8x1xf32>
    %39 = math.rsqrt %38 : vector<8x1xf32>
    %40 = vector.broadcast %39 : vector<8x1xf32> to vector<8x32xf32>
    %41 = arith.mulf %31, %40 : vector<8x32xf32>
    %c0_18 = arith.constant 0 : index
    %c0_19 = arith.constant 0 : index
    %42 = vector.load %arg6[%c0_18, %c0_19] : memref<1x32xf32, #tpu.memory_space<vmem>>, vector<1x32xf32>
    %43 = vector.broadcast %42 : vector<1x32xf32> to vector<8x32xf32>
    %44 = arith.mulf %43, %41 : vector<8x32xf32>
    %c0_20 = arith.constant 0 : index
    %c0_21 = arith.constant 0 : index
    %45 = vector.load %arg7[%c0_20, %c0_21] : memref<1x32xf32, #tpu.memory_space<vmem>>, vector<1x32xf32>
    %46 = vector.broadcast %45 : vector<1x32xf32> to vector<8x32xf32>
    %47 = arith.addf %44, %46 : vector<8x32xf32>
    %c0_22 = arith.constant 0 : index
    %c0_23 = arith.constant 0 : index
    %c0_24 = arith.constant 0 : index
    %48 = vector.load %arg8[%c0_22, %c0_23, %c0_24] : memref<1x8x32xf32, #tpu.memory_space<vmem>>, vector<1x8x32xf32>
    %49 = vector.shape_cast %48 : vector<1x8x32xf32> to vector<8x32xf32>
    %50 = vector.shape_cast %47 : vector<8x32xf32> to vector<1x8x32xf32>
    tpu.vector_store %arg8[%c0_22, %c0_23, %c0_24], %50 {strides = array<i32>} : memref<1x8x32xf32, #tpu.memory_space<vmem>>, vector<1x8x32xf32>,
    return
  }
  func.func @transform_0(%arg0: i32, %arg1: i32) -> (i32, i32, i32) {
    %c0_i32 = arith.constant 0 : i32
    %c0_i32_0 = arith.constant 0 : i32
    return %arg0, %arg1, %c0_i32 : i32, i32, i32
  }
  func.func @transform_1(%arg0: i32, %arg1: i32) -> (i32, i32, i32) {
    %c0_i32 = arith.constant 0 : i32
    %c0_i32_0 = arith.constant 0 : i32
    return %arg0, %arg1, %c0_i32 : i32, i32, i32
  }
  func.func @transform_2(%arg0: i32, %arg1: i32) -> (i32, i32) {
    %c0_i32 = arith.constant 0 : i32
    %c0_i32_0 = arith.constant 0 : i32
    return %arg1, %c0_i32 : i32, i32
  }
  func.func @transform_3(%arg0: i32, %arg1: i32) -> (i32, i32) {
    %c0_i32 = arith.constant 0 : i32
    %c0_i32_0 = arith.constant 0 : i32
    %c0_i32_1 = arith.constant 0 : i32
    return %c0_i32, %c0_i32_0 : i32, i32
  }
  func.func @transform_4(%arg0: i32, %arg1: i32) -> (i32, i32) {
    %c0_i32 = arith.constant 0 : i32
    %c0_i32_0 = arith.constant 0 : i32
    %c0_i32_1 = arith.constant 0 : i32
    return %c0_i32, %c0_i32_0 : i32, i32
  }
  func.func @transform_5(%arg0: i32, %arg1: i32) -> (i32, i32) {
    %c0_i32 = arith.constant 0 : i32
    %c0_i32_0 = arith.constant 0 : i32
    %c0_i32_1 = arith.constant 0 : i32
    return %c0_i32, %c0_i32_0 : i32, i32
  }
  func.func @transform_6(%arg0: i32, %arg1: i32) -> (i32, i32, i32) {
    %c0_i32 = arith.constant 0 : i32
    %c0_i32_0 = arith.constant 0 : i32
    return %arg0, %arg1, %c0_i32 : i32, i32, i32
  }
}

</mosaic_0001>

<llo_original>
// kernel: tpu_custom_call.1
$region0: #{tpu_custom_call.1}
  #allocation0 [shape = 'u32[]', space=smem, size = 0x4, offset = 0x4, fixed_abs, tag = 'smem constant byte address 0x4 - core index']
  #allocation1 [shape = 'u32[144,128]{1,0:T(1,128)}', space=vmem, size = 0x12000, scoped, tag = 'internal scratch']
  %s0 = inlined_call_operand.vmem [shape: f32[2,8,32], index: 0, kind: input, shape index: {}]
  %s1 = inlined_call_operand.vmem [shape: s32[2,8,1], index: 1, kind: input, shape index: {}]
  %s2 = inlined_call_operand.hbm [shape: f32[8,32], index: 2, kind: input, shape index: {}]
  %s3 = inlined_call_operand.vmem [shape: f32[2,32], index: 3, kind: input, shape index: {}]
  %s4 = inlined_call_operand.vmem [shape: f32[1,32], index: 4, kind: input, shape index: {}]
  %s5 = inlined_call_operand.vmem [shape: f32[1,32], index: 5, kind: input, shape index: {}]
  %s6 = inlined_call_operand.hbm [shape: f32[2,8,32], index: 6, kind: output, shape index: {}]
  %s7 = sld [smem:[#allocation0]]
  $region61: #{tpu_custom_call.1} parent=0
    _
  %s9 = ssub.s32 1, %s7
  %s10 = scalar_select 0, %s9, %s7
  $region1: #{tpu_custom_call.1} parent=0
    #allocation2 [shape = 'u8[4096]{0}', space=vmem, size = 0x1000, scoped, tag = 'input window, operand 2, single buffered']
    #allocation3 [shape = 's32[2]{0}', space=sflag, size = 0x8, scoped, tag = 'scoped memory for tpu_custom_call.1']
    #allocation4 [shape = 's32[2]{0}', space=sflag, size = 0x8, scoped, tag = 'scoped memory for tpu_custom_call.1']
    #allocation5 [shape = 'u8[8192]{0}', space=vmem, size = 0x2000, scoped, tag = 'output window, operand 0']
    %11 = vsyncpa [#allocation3], 0
    %12 = vsyncpa [#allocation4], 0
    %s13 = scalar_lea.sflag [#allocation4], 1
    %14 = vsyncpa %s13, 0
    loop: start=0, step=1, limit=4
    $region2: #{tpu_custom_call.1} parent=1 // loop_pre_header
      _
    $region3: #{tpu_custom_call.1} parent=1 // loop_header
      %s16 = sphi 0, %s20
      %p17 = scmp.ge.s32.totalorder %s16, 4
      %s23 = sphi 0, %s35
      %s24 = sphi 0, %s31
      %s25 = sphi 0, %s23
      %s26 = sphi 0, %s24
      %s27 = sphi 0, %s25
      %s28 = sphi 0, %s26
      %s40 = sphi 0, %s42
      %s43 = sphi 0, %s40
      %s44 = sphi 0, %s43
      %s60 = sphi 0, %s44
      %s68 = sphi 0, %s70
      %s71 = sphi 0, %s68
      %s72 = sphi 0, %s71
      %s88 = sphi 0, %s72
      %s94 = sphi 0, %s96
      %s97 = sphi 0, %s94
      %s98 = sphi 0, %s97
      %s114 = sphi 0, %s98
      %s118 = sphi 0, %s118
      %s120 = sphi 0, %s118
      %s121 = sphi 0, %s120
      %s135 = sphi 0, %s121
      %s139 = sphi 0, %s139
      %s141 = sphi 0, %s139
      %s142 = sphi 0, %s141
      %s156 = sphi 0, %s142
      %s160 = sphi 0, %s160
      %s162 = sphi 0, %s160
      %s163 = sphi 0, %s162
      %s177 = sphi 0, %s163
      %s185 = sphi 0, %s187
      %s188 = sphi 0, %s185
      %s189 = sphi 0, %s188
      %s205 = sphi 0, %s189
    $region4: #{tpu_custom_call.1} parent=1 // loop_header_branch
      %19 = sbr.rel (%p17) target = $region8
    $region5: #{tpu_custom_call.1} parent=1 // loop_body
      %s21 = ssub.s32 %s16, 1
      %s22 = ssub.s32 %s16, 2
      %s29 = sadd.s32 1, %s24
      %p30 = scmp.ge.s32.totalorder %s29, 1
      %s31 = scalar_select %p30, 0, %s29
      %s32 = sadd.s32 1, %s23
      %s33 = scalar_select %p30, %s32, %s23
      %p34 = scmp.ge.s32.totalorder %s33, 2
      %s35 = scalar_select %p34, 0, %s33
      %s36 = ssub.s32 %s23, %s35
      %s37 = ssub.s32 %s24, %s31
      %s38 = sor.u32 %s36, %s37
      %p39 = scmp.eq.s32.totalorder %s38, 0
      %s41 = sadd.s32 %s40, 1
      %s42 = scalar_select %p39, %s40, %s41
      %p45 = pneg %p39
      %p46 = scmp.eq.s32.totalorder %s16, 1
      %p47 = por %p45, %p46
      %p48 = scmp.ne.s32.totalorder %s40, %s43
      %p49 = scmp.eq.s32.totalorder %s16, 0
      %p50 = por %p48, %p49
      %p51 = scmp.ne.s32.totalorder %s40, %s43
      %p52 = scmp.eq.s32.totalorder %s21, 1
      %p53 = por %p51, %p52
      %p54 = scmp.ne.s32.totalorder %s43, %s44
      %p55 = scmp.eq.s32.totalorder %s21, 0
      %p56 = por %p54, %p55
      %p57 = scmp.ne.s32.totalorder %s43, %s44
      %p58 = scmp.eq.s32.totalorder %s22, 1
      %p59 = por %p57, %p58
      %p61 = scmp.ne.s32.totalorder %s44, %s60
      %p62 = scmp.eq.s32.totalorder %s22, 0
      %p63 = por %p61, %p62
      %s64 = ssub.s32 %s23, %s35
      %s65 = ssub.s32 %s24, %s31
      %s66 = sor.u32 %s64, %s65
      %p67 = scmp.eq.s32.totalorder %s66, 0
      %s69 = sadd.s32 %s68, 1
      %s70 = scalar_select %p67, %s68, %s69
      %p73 = pneg %p67
      %p74 = scmp.eq.s32.totalorder %s16, 1
      %p75 = por %p73, %p74
      %p76 = scmp.ne.s32.totalorder %s68, %s71
      %p77 = scmp.eq.s32.totalorder %s16, 0
      %p78 = por %p76, %p77
      %p79 = scmp.ne.s32.totalorder %s68, %s71
      %p80 = scmp.eq.s32.totalorder %s21, 1
      %p81 = por %p79, %p80
      %p82 = scmp.ne.s32.totalorder %s71, %s72
      %p83 = scmp.eq.s32.totalorder %s21, 0
      %p84 = por %p82, %p83
      %p85 = scmp.ne.s32.totalorder %s71, %s72
      %p86 = scmp.eq.s32.totalorder %s22, 1
      %p87 = por %p85, %p86
      %p89 = scmp.ne.s32.totalorder %s72, %s88
      %p90 = scmp.eq.s32.totalorder %s22, 0
      %p91 = por %p89, %p90
      %s92 = ssub.s32 %s24, %s31
      %p93 = scmp.eq.s32.totalorder %s92, 0
      %s95 = sadd.s32 %s94, 1
      %s96 = scalar_select %p93, %s94, %s95
      %p99 = pneg %p93
      %p100 = scmp.eq.s32.totalorder %s16, 1
      %p101 = por %p99, %p100
      %p102 = scmp.ne.s32.totalorder %s94, %s97
      %p103 = scmp.eq.s32.totalorder %s16, 0
      %p104 = por %p102, %p103
      %p105 = scmp.ne.s32.totalorder %s94, %s97
      %p106 = scmp.eq.s32.totalorder %s21, 1
      %p107 = por %p105, %p106
      %p108 = scmp.ne.s32.totalorder %s97, %s98
      %p109 = scmp.eq.s32.totalorder %s21, 0
      %p110 = por %p108, %p109
      %p111 = scmp.ne.s32.totalorder %s97, %s98
      %p112 = scmp.eq.s32.totalorder %s22, 1
      %p113 = por %p111, %p112
      %p115 = scmp.ne.s32.totalorder %s98, %s114
      %p116 = scmp.eq.s32.totalorder %s22, 0
      %p117 = por %p115, %p116
      %s119 = sadd.s32 %s118, 1
      %p122 = scmp.eq.s32.totalorder %s16, 1
      %p123 = scmp.ne.s32.totalorder %s118, %s120
      %p124 = scmp.eq.s32.totalorder %s16, 0
      %p125 = por %p123, %p124
      %p126 = scmp.ne.s32.totalorder %s118, %s120
      %p127 = scmp.eq.s32.totalorder %s21, 1
      %p128 = por %p126, %p127
      %p129 = scmp.ne.s32.totalorder %s120, %s121
      %p130 = scmp.eq.s32.totalorder %s21, 0
      %p131 = por %p129, %p130
      %p132 = scmp.ne.s32.totalorder %s120, %s121
      %p133 = scmp.eq.s32.totalorder %s22, 1
      %p134 = por %p132, %p133
      %p136 = scmp.ne.s32.totalorder %s121, %s135
      %p137 = scmp.eq.s32.totalorder %s22, 0
      %p138 = por %p136, %p137
      %s140 = sadd.s32 %s139, 1
      %p143 = scmp.eq.s32.totalorder %s16, 1
      %p144 = scmp.ne.s32.totalorder %s139, %s141
      %p145 = scmp.eq.s32.totalorder %s16, 0
      %p146 = por %p144, %p145
      %p147 = scmp.ne.s32.totalorder %s139, %s141
      %p148 = scmp.eq.s32.totalorder %s21, 1
      %p149 = por %p147, %p148
      %p150 = scmp.ne.s32.totalorder %s141, %s142
      %p151 = scmp.eq.s32.totalorder %s21, 0
      %p152 = por %p150, %p151
      %p153 = scmp.ne.s32.totalorder %s141, %s142
      %p154 = scmp.eq.s32.totalorder %s22, 1
      %p155 = por %p153, %p154
      %p157 = scmp.ne.s32.totalorder %s142, %s156
      %p158 = scmp.eq.s32.totalorder %s22, 0
      %p159 = por %p157, %p158
      %s161 = sadd.s32 %s160, 1
      %p164 = scmp.eq.s32.totalorder %s16, 1
      %p165 = scmp.ne.s32.totalorder %s160, %s162
      %p166 = scmp.eq.s32.totalorder %s16, 0
      %p167 = por %p165, %p166
      %p168 = scmp.ne.s32.totalorder %s160, %s162
      %p169 = scmp.eq.s32.totalorder %s21, 1
      %p170 = por %p168, %p169
      %p171 = scmp.ne.s32.totalorder %s162, %s163
      %p172 = scmp.eq.s32.totalorder %s21, 0
      %p173 = por %p171, %p172
      %p174 = scmp.ne.s32.totalorder %s162, %s163
      %p175 = scmp.eq.s32.totalorder %s22, 1
      %p176 = por %p174, %p175
      %p178 = scmp.ne.s32.totalorder %s163, %s177
      %p179 = scmp.eq.s32.totalorder %s22, 0
      %p180 = por %p178, %p179
      %s181 = ssub.s32 %s23, %s35
      %s182 = ssub.s32 %s24, %s31
      %s183 = sor.u32 %s181, %s182
      %p184 = scmp.eq.s32.totalorder %s183, 0
      %s186 = sadd.s32 %s185, 1
      %s187 = scalar_select %p184, %s185, %s186
      %p190 = pneg %p184
      %p191 = scmp.eq.s32.totalorder %s16, 1
      %p192 = por %p190, %p191
      %p193 = scmp.ne.s32.totalorder %s185, %s188
      %p194 = scmp.eq.s32.totalorder %s16, 0
      %p195 = por %p193, %p194
      %p196 = scmp.ne.s32.totalorder %s185, %s188
      %p197 = scmp.eq.s32.totalorder %s21, 1
      %p198 = por %p196, %p197
      %p199 = scmp.ne.s32.totalorder %s188, %s189
      %p200 = scmp.eq.s32.totalorder %s21, 0
      %p201 = por %p199, %p200
      %p202 = scmp.ne.s32.totalorder %s188, %s189
      %p203 = scmp.eq.s32.totalorder %s22, 1
      %p204 = por %p202, %p203
      %p206 = scmp.ne.s32.totalorder %s189, %s205
      %p207 = scmp.eq.s32.totalorder %s22, 0
      %p208 = por %p206, %p207
      %p209 = scmp.le.s32.totalorder 1, %s16
      %p210 = scmp.lt.s32.totalorder %s16, 3
      %p211 = pnand %p209, %p210
      %p212 = pneg %p211
      // Predicated region
      $region9: #{tpu_custom_call.1} parent=5 // pred_check
        _
      $region10: #{tpu_custom_call.1} parent=5 // pred_check_branch
        %214 = sbr.rel (%p211) target = $region12
      $region11: #{tpu_custom_call.1} parent=5 // pred_region
        %s215 = ssub.s32 %s16, 1
        // Predicated region
        $region13: #{tpu_custom_call.1} parent=11 // pred_check
          %p216 = pneg %p110
        $region14: #{tpu_custom_call.1} parent=11 // pred_check_branch
          %218 = sbr.rel (%p216) target = $region16
        $region15: #{tpu_custom_call.1} parent=11 // pred_region
          %s220 = ssub.s32 128, 128
          %221 = vsyncadd [#allocation3], %s220
          %s222 = smul.addr %s26, 128
          %s223 = scalar_lea.hbm %s2, %s222
          %s225 = sshll.u32 [#allocation2], 4
          %s226 = int_to_ptr.vmem [resolvable:$true] %s225
          %228 = dma.hbm_to_vmem [thread:$0]  %s223, 128, %s226, [#allocation3]
        $region16: #{tpu_custom_call.1} parent=11 // pred_fallthru
          _
        // Predicated region
        $region17: #{tpu_custom_call.1} parent=11 // pred_check
          %p229 = pneg %p131
        $region18: #{tpu_custom_call.1} parent=11 // pred_check_branch
          %231 = sbr.rel (%p229) target = $region20
        $region19: #{tpu_custom_call.1} parent=11 // pred_region
          _
        $region20: #{tpu_custom_call.1} parent=11 // pred_fallthru
          _
        // Predicated region
        $region21: #{tpu_custom_call.1} parent=11 // pred_check
          %p232 = pneg %p152
        $region22: #{tpu_custom_call.1} parent=11 // pred_check_branch
          %234 = sbr.rel (%p232) target = $region24
        $region23: #{tpu_custom_call.1} parent=11 // pred_region
          _
        $region24: #{tpu_custom_call.1} parent=11 // pred_fallthru
          _
        // Predicated region
        $region25: #{tpu_custom_call.1} parent=11 // pred_check
          %p235 = pneg %p173
        $region26: #{tpu_custom_call.1} parent=11 // pred_check_branch
          %237 = sbr.rel (%p235) target = $region28
        $region27: #{tpu_custom_call.1} parent=11 // pred_region
          _
        $region28: #{tpu_custom_call.1} parent=11 // pred_fallthru
          _
      $region12: #{tpu_custom_call.1} parent=5 // pred_fallthru
        _
      %p238 = scmp.lt.s32.totalorder %s16, 2
      // Predicated region
      $region29: #{tpu_custom_call.1} parent=5 // pred_check
        %p239 = pneg %p238
      $region30: #{tpu_custom_call.1} parent=5 // pred_check_branch
        %241 = sbr.rel (%p239) target = $region32
      $region31: #{tpu_custom_call.1} parent=5 // pred_region
        // Predicated region
        $region33: #{tpu_custom_call.1} parent=31 // pred_check
          %p242 = pneg %p50
        $region34: #{tpu_custom_call.1} parent=31 // pred_check_branch
          %244 = sbr.rel (%p242) target = $region36
        $region35: #{tpu_custom_call.1} parent=31 // pred_region
          %p245 = scmp.lt.s32.totalorder %s23, 1
          %s246 = scalar_select %p245, %s23, 1
          %p247 = scmp.lt.s32.totalorder %s24, 0
          %s248 = scalar_select %p247, %s24, 0
          %s249 = sadd.s32 %s248, %s246
          %s250 = smul.addr %s249, 8
          %s251 = scalar_lea.vmem %s0, %s250
        $region36: #{tpu_custom_call.1} parent=31 // pred_fallthru
          _
        // Predicated region
        $region37: #{tpu_custom_call.1} parent=31 // pred_check
          %p252 = pneg %p78
        $region38: #{tpu_custom_call.1} parent=31 // pred_check_branch
          %254 = sbr.rel (%p252) target = $region40
        $region39: #{tpu_custom_call.1} parent=31 // pred_region
          %p255 = scmp.lt.s32.totalorder %s23, 1
          %s256 = scalar_select %p255, %s23, 1
          %p257 = scmp.lt.s32.totalorder %s24, 0
          %s258 = scalar_select %p257, %s24, 0
          %s259 = sadd.s32 %s258, %s256
          %s260 = smul.addr %s259, 8
          %s261 = scalar_lea.vmem %s1, %s260
        $region40: #{tpu_custom_call.1} parent=31 // pred_fallthru
          _
      $region32: #{tpu_custom_call.1} parent=5 // pred_fallthru
        _
      %p262 = scmp.le.s32.totalorder 1, %s16
      %p263 = scmp.lt.s32.totalorder %s16, 3
      %p264 = pnand %p262, %p263
      %p265 = pneg %p264
      // Predicated region
      $region41: #{tpu_custom_call.1} parent=5 // pred_check
        _
      $region42: #{tpu_custom_call.1} parent=5 // pred_check_branch
        %267 = sbr.rel (%p264) target = $region44
      $region43: #{tpu_custom_call.1} parent=5 // pred_region
        %s268 = ssub.s32 %s16, 1
        // Predicated region
        $region45: #{tpu_custom_call.1} parent=43 // pred_check
          %p269 = pneg %p110
        $region46: #{tpu_custom_call.1} parent=43 // pred_check_branch
          %271 = sbr.rel (%p269) target = $region48
        $region47: #{tpu_custom_call.1} parent=43 // pred_region
          %272 = dma.done [#allocation3], 128
        $region48: #{tpu_custom_call.1} parent=43 // pred_fallthru
          _
        %p273 = scmp.lt.s32.totalorder %s25, 1
        %s274 = scalar_select %p273, %s25, 1
        %p275 = scmp.lt.s32.totalorder %s26, 0
        %s276 = scalar_select %p275, %s26, 0
        %s277 = sadd.s32 %s276, %s274
        %s278 = smul.addr %s277, 8
        %s279 = scalar_lea.vmem %s0, %s278
        %p280 = pneg %p56
        %p281 = pneg %p53
        %p282 = scmp.lt.s32.totalorder %s25, 1
        %s283 = scalar_select %p282, %s25, 1
        %p284 = scmp.lt.s32.totalorder %s26, 0
        %s285 = scalar_select %p284, %s26, 0
        %s286 = sadd.s32 %s285, %s283
        %s287 = smul.addr %s286, 8
        %s288 = scalar_lea.vmem %s1, %s287
        %p289 = pneg %p84
        %p290 = pneg %p81
        %p291 = pneg %p110
        %p292 = pneg %p107
        %p293 = pneg %p131
        %p294 = pneg %p128
        %p295 = pneg %p152
        %p296 = pneg %p149
        %p297 = pneg %p173
        %p298 = pneg %p170
        %p299 = pneg %p201
        %p300 = pneg %p198
        %s301 = sand.u32 %s188, 1
        %s302 = scalar_lea.sflag [#allocation4], %s301
        %s303 = sand.u32 %s188, 1
        %s304 = smul.addr %s303, 8
        %s305 = scalar_lea.vmem [#allocation5], %s304
        %p306 = scmp.lt.s32.totalorder %s25, 1
        %s307 = scalar_select %p306, %s25, 1
        %p308 = scmp.lt.s32.totalorder %s26, 0
        %s309 = scalar_select %p308, %s26, 0
        %s310 = sadd.s32 %s309, %s307
        %s311 = smul.addr %s310, 8
        %s312 = scalar_lea.vmem %s0, %s311
        %p313 = scmp.lt.s32.totalorder %s25, 1
        %s314 = scalar_select %p313, %s25, 1
        %p315 = scmp.lt.s32.totalorder %s26, 0
        %s316 = scalar_select %p315, %s26, 0
        %s317 = sadd.s32 %s316, %s314
        %s318 = smul.addr %s317, 8
        %s319 = scalar_lea.vmem %s1, %s318
        %v320 = vld [vmem:[%s312] sm:$0xff]
        %v321 = vld [vmem:[#allocation2] sm:$0xff]
        %v322 = vadd.f32 %v320, %v321
        %v323 = vld [vmem:[%s319] sm:$0xff]
        %v324 = vld [vmem:[%s3] sm:$0x1]
        %vm325 = vcmp.eq.s32.totalorder %v323, 0
        %v326 = vsel %vm325, 1.0, 0.0
        %328 = vset.pattern.permute.xlu0 0
        %329 = vperm.xlu0 %328, %v326
        %v330 = vpop.permute.xlu0 %329
        %v332 = vlaneseq
        %v333 = vshrl.u32 %v332, 7
        %v334 = vsub.s32 0, %v333
        %v335 = vrot.slane %v324, %v334
        %v336 = vmul.f32 %v330, %v335
        %v337 = vadd.f32 %v322, %v336
        %v338 = vld [vmem:[%s3 + $0x1] sm:$0x1]
        %vm339 = vcmp.eq.s32.totalorder %v323, 1
        %v340 = vsel %vm339, 1.0, 0.0
        %342 = vset.pattern.permute.xlu0 0
        %343 = vperm.xlu0 %342, %v340
        %v344 = vpop.permute.xlu0 %343
        %v346 = vlaneseq
        %v347 = vshrl.u32 %v346, 7
        %v348 = vsub.s32 0, %v347
        %v349 = vrot.slane %v338, %v348
        %v350 = vmul.f32 %v344, %v349
        %v351 = vadd.f32 %v337, %v350
        %vm352 = vcmask 261120
        %v353 = vsel %vm352, %v351, 0.0
        %354 = vadd.xlane.f32.xlu0 %v353
        %v355 = vpop.xlane.xlu0 %354
        %v356 = vrcp.pop 32.0
        %v357 = vmul.f32 %v355, %v356
        %v358 = vsub.f32 %v351, %v357
        %v359 = vmul.f32 %v358, %v358
        %v360 = vsel %vm352, %v359, 0.0
        %361 = vadd.xlane.f32.xlu0 %v360
        %v362 = vpop.xlane.xlu0 %361
        %v363 = vmul.f32 %v362, %v356
        %v364 = vadd.f32 %v363, 1e-12
        %v365 = vrsqrt.pop %v364
        %v366 = vmul.f32 %v358, %v365
        %v367 = vld [vmem:[%s4] sm:$0x1]
        %v369 = vlaneseq
        %v370 = vshrl.u32 %v369, 7
        %v371 = vsub.s32 0, %v370
        %v372 = vrot.slane %v367, %v371
        %v374 = vmul.f32 %v372, %v366
        %v375 = vld [vmem:[%s5] sm:$0x1]
        %v377 = vlaneseq
        %v378 = vshrl.u32 %v377, 7
        %v379 = vsub.s32 0, %v378
        %v380 = vrot.slane %v375, %v379
        %v382 = vadd.f32 %v374, %v380
        %383 = vst.msk [vmem:[%s305] sm:$0xff] %vm352, %v382
        %s384 = sand.u32 %s188, 1
        %s385 = scalar_lea.sflag [#allocation4], %s384
        %s386 = sand.u32 %s188, 1
        %s387 = smul.addr %s386, 8
        %s388 = scalar_lea.vmem [#allocation5], %s387
        // Predicated region
        $region49: #{tpu_custom_call.1} parent=43 // pred_check
          %p389 = pneg %p198
        $region50: #{tpu_custom_call.1} parent=43 // pred_check_branch
          %391 = sbr.rel (%p389) target = $region52
        $region51: #{tpu_custom_call.1} parent=43 // pred_region
          %s393 = ssub.s32 128, 128
          %394 = vsyncadd %s385, %s393
          %s395 = sadd.s32 %s26, %s25
          %s396 = smul.addr %s395, 128
          %s397 = scalar_lea.hbm %s6, %s396
          %s399 = sshll.u32 %s388, 4
          %s400 = int_to_ptr.vmem [resolvable:$true] %s399
          %402 = dma.vmem_to_hbm [thread:$0]  %s400, 128, %s397, %s385
        $region52: #{tpu_custom_call.1} parent=43 // pred_fallthru
          _
      $region44: #{tpu_custom_call.1} parent=5 // pred_fallthru
        _
      %p403 = scmp.le.s32.totalorder 2, %s16
      // Predicated region
      $region53: #{tpu_custom_call.1} parent=5 // pred_check
        %p404 = pneg %p403
      $region54: #{tpu_custom_call.1} parent=5 // pred_check_branch
        %406 = sbr.rel (%p404) target = $region56
      $region55: #{tpu_custom_call.1} parent=5 // pred_region
        %s407 = ssub.s32 %s16, 2
        // Predicated region
        $region57: #{tpu_custom_call.1} parent=55 // pred_check
          %p408 = pneg %p204
        $region58: #{tpu_custom_call.1} parent=55 // pred_check_branch
          %410 = sbr.rel (%p408) target = $region60
        $region59: #{tpu_custom_call.1} parent=55 // pred_region
          %s411 = sand.u32 %s189, 1
          %s412 = scalar_lea.sflag [#allocation4], %s411
          %s413 = sand.u32 %s189, 1
          %s414 = smul.addr %s413, 8
          %s415 = scalar_lea.vmem [#allocation5], %s414
          %416 = dma.done %s412, 128
        $region60: #{tpu_custom_call.1} parent=55 // pred_fallthru
          _
      $region56: #{tpu_custom_call.1} parent=5 // pred_fallthru
        _
    $region6: #{tpu_custom_call.1} parent=1 // loop_footer
      %s20 = sadd.s32 1, %s16
    $region7: #{tpu_custom_call.1} parent=1 // loop_footer_branch
      %15 = sbr.rel target = $region3
    $region8: #{tpu_custom_call.1} parent=1 // loop_exit
      _
    %417 = vsyncpa [#allocation3], 1
    %s418 = scalar_lea.sflag [#allocation3], 1
    %419 = vsyncpa %s418, 1
    %420 = vsyncpa [#allocation4], 1
    %s421 = scalar_lea.sflag [#allocation4], 1
    %422 = vsyncpa %s421, 1

</llo_original>
